<compile_context>
chip_gen: v5e
topology: v5e:2x2
jax: 0.10.0
libtpu: 0.0.40
codegen_flags: <defaults>
</compile_context>

<pallas_src>
from collections import OrderedDict

import numpy as np
import jax
import jax.numpy as jnp
from jax.experimental import pallas as pl
from jax.experimental.pallas import tpu as pltpu


# ----------------------------------------------------------------------------
# Config (small, consistent with the module: in_channels=3, out_dim=9,
# n_hidden=3; n_kernels / hidden_dim shrunk for a quick synthetic run).
# ----------------------------------------------------------------------------
N_NODES = 10
EMBED_DIM = 32
HIDDEN_DIM = 32
IN_CHANNELS = 3
OUT_DIM = 9
N_KERNELS = 4
N_HIDDEN = 3


def head_layout(nk, in_c, out_dim):
    """(name, target_shape) for every hypernetwork head, in forward() order."""
    return [
        ("conv1.weight", (nk, in_c, 3, 3)), ("conv1.bias", (nk,)),
        ("conv_1_1_1.weight", (nk, nk, 3, 3)), ("conv_1_1_1.bias", (nk,)),
        ("conv_1_1_2.weight", (nk, nk, 3, 3)), ("conv_1_1_2.bias", (nk,)),
        ("conv_1_2_1.weight", (nk, nk, 3, 3)), ("conv_1_2_1.bias", (nk,)),
        ("conv_1_2_2.weight", (nk, nk, 3, 3)), ("conv_1_2_2.bias", (nk,)),
        ("conv_2_1_1.weight", (2 * nk, nk, 3, 3)), ("conv_2_1_1.bias", (2 * nk,)),
        ("conv_2_1_2.weight", (2 * nk, 2 * nk, 3, 3)), ("conv_2_1_2.bias", (2 * nk,)),
        ("conv_2_1_3.weight", (2 * nk, nk, 1, 1)), ("conv_2_1_3.bias", (2 * nk,)),
        ("conv_2_2_1.weight", (2 * nk, 2 * nk, 3, 3)), ("conv_2_2_1.bias", (2 * nk,)),
        ("conv_2_2_2.weight", (2 * nk, 2 * nk, 3, 3)), ("conv_2_2_2.bias", (2 * nk,)),
        ("conv_3_1_1.weight", (4 * nk, 2 * nk, 3, 3)), ("conv_3_1_1.bias", (4 * nk,)),
        ("conv_3_1_2.weight", (4 * nk, 4 * nk, 3, 3)), ("conv_3_1_2.bias", (4 * nk,)),
        ("conv_3_1_3.weight", (4 * nk, 2 * nk, 1, 1)), ("conv_3_1_3.bias", (4 * nk,)),
        ("conv_3_2_1.weight", (4 * nk, 4 * nk, 3, 3)), ("conv_3_2_1.bias", (4 * nk,)),
        ("conv_3_2_2.weight", (4 * nk, 4 * nk, 3, 3)), ("conv_3_2_2.bias", (4 * nk,)),
        ("conv_4_1_1.weight", (8 * nk, 4 * nk, 3, 3)), ("conv_4_1_1.bias", (8 * nk,)),
        ("conv_4_1_2.weight", (8 * nk, 8 * nk, 3, 3)), ("conv_4_1_2.bias", (8 * nk,)),
        ("conv_4_1_3.weight", (8 * nk, 4 * nk, 1, 1)), ("conv_4_1_3.bias", (8 * nk,)),
        ("conv_4_2_1.weight", (8 * nk, 8 * nk, 3, 3)), ("conv_4_2_1.bias", (8 * nk,)),
        ("conv_4_2_2.weight", (8 * nk, 8 * nk, 3, 3)), ("conv_4_2_2.bias", (8 * nk,)),
        ("linear.weight", (out_dim, 8 * nk)), ("linear.bias", (out_dim,)),
    ]


# ----------------------------------------------------------------------------
# Deterministic parameter initialization (PyTorch-default-like uniform bounds).
# ----------------------------------------------------------------------------
def init_linear(key, in_f, out_f):
    kw, kb = jax.random.split(key)
    bound = 1.0 / np.sqrt(in_f)
    w = jax.random.uniform(kw, (out_f, in_f), jnp.float32, -bound, bound)
    b = jax.random.uniform(kb, (out_f,), jnp.float32, -bound, bound)
    return w, b


def init_params(key):
    keys = jax.random.split(key, 64)
    ki = iter(range(64))

    # Embedding table (PyTorch nn.Embedding default: N(0, 1)).
    emb_table = jax.random.normal(keys[next(ki)], (N_NODES, EMBED_DIM), jnp.float32)

    # MLP: Linear(E,H) then n_hidden x [ReLU, Linear(H,H)]  -> 4 Linear layers.
    mlp_raw = [init_linear(keys[next(ki)], EMBED_DIM, HIDDEN_DIM)]
    for _ in range(N_HIDDEN):
        mlp_raw.append(init_linear(keys[next(ki)], HIDDEN_DIM, HIDDEN_DIM))

    # Per-head Linear(H, prod(shape)).
    layout = head_layout(N_KERNELS, IN_CHANNELS, OUT_DIM)
    heads_raw = []
    for _, shape in layout:
        out_f = int(np.prod(shape))
        heads_raw.append(init_linear(keys[next(ki)], HIDDEN_DIM, out_f))

    return emb_table, mlp_raw, heads_raw, layout


# ----------------------------------------------------------------------------
# Tile sizing + one-time weight prep.
# ----------------------------------------------------------------------------
def choose_head_tile(total, hidden, target_step_bytes=2 * 1024 * 1024,
                     lane_mult=512, min_steps=8):
    """Tile width over the concatenated head dimension.

    Cap so each grid step streams ~target_step_bytes of bf16 weights
    (amortizes the ~0.35us/step pipeline overhead; keeps the double-buffered
    working set far under v7x's 64 MiB VMEM), but floor so small problems
    still get >= min_steps grid steps for v7x megacore balance.
    """
    def round_up(x, m):
        return ((x + m - 1) // m) * m

    cap = max(lane_mult, (target_step_bytes // (hidden * 2)) // lane_mult * lane_mult)
    want = round_up(max(1, -(-total // min_steps)), lane_mult)
    return max(lane_mult, min(cap, want))


def prepare_params(mlp_raw, heads_raw):
    """Init-time prep: transpose / concat / pad / bf16 cast / block-reshape.

    Hoisted out of the forward path so the forward never re-materializes the
    big head matrix.
    """
    # MLP weights pre-transposed to (in, out), biases as (1, out) rows (f32).
    mlp_prep = [(w.T, b[None, :]) for (w, b) in mlp_raw]

    hidden = int(heads_raw[0][0].shape[1])

    # Concatenate all heads into one (H, total) matrix + (total,) bias.
    w_all = jnp.concatenate([w.T for (w, _) in heads_raw], axis=1)   # (H, total)
    b_all = jnp.concatenate([b for (_, b) in heads_raw], axis=0)     # (total,)
    total = int(w_all.shape[1])

    tile = choose_head_tile(total, hidden)
    n_tiles = -(-total // tile)
    if n_tiles > 1 and n_tiles % 2:      # even grid -> balanced v7x megacore split
        n_tiles += 1
    total_p = n_tiles * tile

    pad = total_p - total
    # Heads stored bf16 (HBM-bandwidth-bound kernel -> 2x less traffic).
    # Pre-reshaped into (n_tiles, hidden, tile) so each grid step's weight
    # block is ONE contiguous HBM region (single large DMA descriptor).
    w_blocks = (jnp.pad(w_all, ((0, 0), (0, pad)))
                .reshape(hidden, n_tiles, tile)
                .transpose(1, 0, 2)
                .astype(jnp.bfloat16))                               # (n_tiles, H, tile)
    b_row = jnp.pad(b_all, ((0, pad),))[None, :].astype(jnp.bfloat16)  # (1, total_p)

    meta = dict(hidden=hidden, total=total, total_p=total_p,
                tile=tile, n_tiles=n_tiles)
    return mlp_prep, w_blocks, b_row, meta


# ----------------------------------------------------------------------------
# Kernel 1: MLP (embedding -> features).  Tiny, single grid step, all-VMEM.
# ----------------------------------------------------------------------------
def mlp_kernel(emb_ref, w0_ref, b0_ref, w1_ref, b1_ref,
               w2_ref, b2_ref, w3_ref, b3_ref, feat_ref):
    h = jnp.dot(emb_ref[...], w0_ref[...],
                preferred_element_type=jnp.float32) + b0_ref[...]
    h = jnp.maximum(h, 0.0)
    h = jnp.dot(h, w1_ref[...], preferred_element_type=jnp.float32) + b1_ref[...]
    h = jnp.maximum(h, 0.0)
    h = jnp.dot(h, w2_ref[...], preferred_element_type=jnp.float32) + b2_ref[...]
    h = jnp.maximum(h, 0.0)
    feat_ref[...] = jnp.dot(h, w3_ref[...],
                            preferred_element_type=jnp.float32) + b3_ref[...]


def run_mlp(emb, mlp_prep):
    embed_dim = int(emb.shape[1])
    hidden = int(mlp_prep[-1][0].shape[1])

    args = [emb]
    in_specs = [pl.BlockSpec((1, embed_dim), lambda i: (0, 0))]
    for (wt, bb) in mlp_prep:
        args += [wt, bb]
        in_specs += [
            pl.BlockSpec(wt.shape, lambda i: (0, 0)),
            pl.BlockSpec(bb.shape, lambda i: (0, 0)),
        ]

    return pl.pallas_call(
        mlp_kernel,
        out_shape=jax.ShapeDtypeStruct((1, hidden), jnp.float32),
        grid=(1,),
        in_specs=in_specs,
        out_specs=pl.BlockSpec((1, hidden), lambda i: (0, 0)),
    )(*args)


# ----------------------------------------------------------------------------
# Kernel 2: all heads.  bf16 operands straight into the MXU, f32 accumulation,
# one contiguous weight block per grid step.
# ----------------------------------------------------------------------------
def head_kernel(feat_ref, w_ref, b_ref, out_ref):
    # feat: (1, H) bf16; w_ref[0]: (H, tile) bf16; f32 accumulate on the MXU.
    acc = jnp.dot(feat_ref[...], w_ref[0], preferred_element_type=jnp.float32)
    out_ref[...] = acc + b_ref[...].astype(jnp.float32)


def run_heads(feat_bf16, w_blocks, b_row, meta):
    hidden = meta["hidden"]
    tile = meta["tile"]
    n_tiles = meta["n_tiles"]
    total_p = meta["total_p"]

    cost = pl.CostEstimate(
        flops=2 * hidden * total_p,
        transcendentals=0,
        bytes_accessed=hidden * total_p * 2 + total_p * 2 + total_p * 4 + hidden * 2,
    )

    return pl.pallas_call(
        head_kernel,
        out_shape=jax.ShapeDtypeStruct((1, total_p), jnp.float32),
        grid=(n_tiles,),
        in_specs=[
            pl.BlockSpec((1, hidden), lambda i: (0, 0)),          # feat (constant)
            pl.BlockSpec((1, hidden, tile), lambda i: (i, 0, 0)),  # contiguous block
            pl.BlockSpec((1, tile), lambda i: (0, i)),             # bf16 bias
        ],
        out_specs=pl.BlockSpec((1, tile), lambda i: (0, i)),
        compiler_params=pltpu.CompilerParams(
            dimension_semantics=("parallel",),
            # Above v5e's 16 MiB scoped default, below v7x's 64 MiB physical
            # with headroom; actual double-buffered need is only a few MB at
            # the ~2 MB/step tile target.
            vmem_limit_bytes=48 * 1024 * 1024,
        ),
        cost_estimate=cost,
    )(feat_bf16, w_blocks, b_row)


# ----------------------------------------------------------------------------
# Full forward: idx -> OrderedDict of generated ResNet18 weights.
# ----------------------------------------------------------------------------
def cnn_hyper_forward(idx, emb_table, mlp_prep, w_blocks, b_row, meta, layout):
    emb = emb_table[idx][None, :]                    # (1, E) embedding lookup
    feat = run_mlp(emb, mlp_prep)                    # (1, H) f32 — Pallas
    feat_bf16 = feat.astype(jnp.bfloat16)            # bf16 operand for the MXU
    flat_p = run_heads(feat_bf16, w_blocks, b_row, meta)  # (1, total_p) — Pallas
    flat = flat_p[0, :meta["total"]]

    # Slice + reshape into the OrderedDict exactly as the PyTorch forward does.
    weights = OrderedDict()
    off = 0
    for name, shape in layout:
        n = int(np.prod(shape))
        weights[name] = flat[off:off + n].reshape(shape)
        off += n
    aux = dict(feat=feat, feat_bf16=feat_bf16, flat=flat)
    return weights, aux


# ----------------------------------------------------------------------------
# Numpy (float64) reference.  Stage 1 checks the MLP; stage 2 checks the head
# matmul using the SAME bf16-quantized operands the kernel consumed, so the
# only remaining difference is f32 vs f64 accumulation (tight tolerance).
# ----------------------------------------------------------------------------
def reference_mlp(idx, emb_table, mlp_raw):
    h = np.asarray(emb_table)[idx].astype(np.float64)
    for li, (w, b) in enumerate(mlp_raw):
        if li > 0:
            h = np.maximum(h, 0.0)
        h = h @ np.asarray(w, np.float64).T + np.asarray(b, np.float64)
    return h


def reference_heads(feat_bf16, w_blocks, b_row, meta):
    hidden, total, total_p = meta["hidden"], meta["total"], meta["total_p"]
    f64 = np.asarray(feat_bf16.astype(jnp.float32), np.float64)          # (1, H)
    w64 = np.asarray(w_blocks.astype(jnp.float32), np.float64)           # (nt, H, tile)
    w64 = w64.transpose(1, 0, 2).reshape(hidden, total_p)[:, :total]
    b64 = np.asarray(b_row.astype(jnp.float32), np.float64)[0, :total]
    return (f64 @ w64)[0] + b64


if __name__ == "__main__":
    key = jax.random.PRNGKey(0)
    emb_table, mlp_raw, heads_raw, layout = init_params(key)
    mlp_prep, w_blocks, b_row, meta = prepare_params(mlp_raw, heads_raw)

    idx = 3  # node index (nn.Embedding lookup index)

    weights, aux = cnn_hyper_forward(idx, emb_table, mlp_prep, w_blocks, b_row,
                                     meta, layout)
    weights = jax.tree_util.tree_map(jax.block_until_ready, weights)

    # Stage 1: MLP check.
    feat_ref = reference_mlp(idx, emb_table, mlp_raw)
    np.testing.assert_allclose(np.asarray(aux["feat"])[0], feat_ref,
                               rtol=1e-3, atol=1e-4)

    # Stage 2: head matmul check (same bf16 operands as the kernel).
    flat_ref = reference_heads(aux["feat_bf16"], w_blocks, b_row, meta)
    np.testing.assert_allclose(np.asarray(aux["flat"]), flat_ref,
                               rtol=1e-3, atol=1e-3)

    # Per-head values are pure reshapes of flat; spot-check the dict contract.
    off = 0
    for name, shape in layout:
        n = int(np.prod(shape))
        assert weights[name].shape == shape
        np.testing.assert_allclose(np.asarray(weights[name]).reshape(-1),
                                   flat_ref[off:off + n], rtol=1e-3, atol=1e-3)
        off += n

    assert weights["conv1.weight"].shape == (N_KERNELS, IN_CHANNELS, 3, 3)
    assert weights["conv_4_2_2.weight"].shape == (8 * N_KERNELS, 8 * N_KERNELS, 3, 3)
    assert weights["linear.weight"].shape == (OUT_DIM, 8 * N_KERNELS)
    assert weights["linear.bias"].shape == (OUT_DIM,)

    print("KERNEL_OK")
</pallas_src>

<mosaic_0001>
module attributes {stable_mosaic.version = 11 : i64} {
  func.func @mlp_kernel(%arg0: i32, %arg1: memref<1x32xf32, #tpu.memory_space<vmem>>, %arg2: memref<32x32xf32, #tpu.memory_space<vmem>>, %arg3: memref<1x32xf32, #tpu.memory_space<vmem>>, %arg4: memref<32x32xf32, #tpu.memory_space<vmem>>, %arg5: memref<1x32xf32, #tpu.memory_space<vmem>>, %arg6: memref<32x32xf32, #tpu.memory_space<vmem>>, %arg7: memref<1x32xf32, #tpu.memory_space<vmem>>, %arg8: memref<32x32xf32, #tpu.memory_space<vmem>>, %arg9: memref<1x32xf32, #tpu.memory_space<vmem>>, %arg10: memref<1x32xf32, #tpu.memory_space<vmem>>) attributes {dimension_semantics = [#tpu.dimension_semantics<arbitrary>], iteration_bounds = array<i64: 1>, scalar_prefetch = 0 : i64, scratch_operands = 0 : i64, tpu.core_type = #tpu.core_type<tc>, window_params = [{pipeline_mode = #tpu.pipeline_mode<synchronous>, transform_indices = @transform_0, window_bounds = array<i64: 1, 32>}, {pipeline_mode = #tpu.pipeline_mode<synchronous>, transform_indices = @transform_1, window_bounds = array<i64: 32, 32>}, {pipeline_mode = #tpu.pipeline_mode<synchronous>, transform_indices = @transform_2, window_bounds = array<i64: 1, 32>}, {pipeline_mode = #tpu.pipeline_mode<synchronous>, transform_indices = @transform_3, window_bounds = array<i64: 32, 32>}, {pipeline_mode = #tpu.pipeline_mode<synchronous>, transform_indices = @transform_4, window_bounds = array<i64: 1, 32>}, {pipeline_mode = #tpu.pipeline_mode<synchronous>, transform_indices = @transform_5, window_bounds = array<i64: 32, 32>}, {pipeline_mode = #tpu.pipeline_mode<synchronous>, transform_indices = @transform_6, window_bounds = array<i64: 1, 32>}, {pipeline_mode = #tpu.pipeline_mode<synchronous>, transform_indices = @transform_7, window_bounds = array<i64: 32, 32>}, {pipeline_mode = #tpu.pipeline_mode<synchronous>, transform_indices = @transform_8, window_bounds = array<i64: 1, 32>}, {pipeline_mode = #tpu.pipeline_mode<synchronous>, transform_indices = @transform_9, window_bounds = array<i64: 1, 32>}]} {
    %c0 = arith.constant 0 : index
    %c0_0 = arith.constant 0 : index
    %0 = vector.load %arg1[%c0, %c0_0] : memref<1x32xf32, #tpu.memory_space<vmem>>, vector<1x32xf32>
    %c0_1 = arith.constant 0 : index
    %c0_2 = arith.constant 0 : index
    %1 = vector.load %arg2[%c0_1, %c0_2] : memref<32x32xf32, #tpu.memory_space<vmem>>, vector<32x32xf32>
    %cst = arith.constant dense<0.000000e+00> : vector<1x32xf32>
    %2 = tpu.matmul %0, %1, %cst {dimension_numbers = #tpu.dot_dimension_numbers<[1], [0], [0], [1], [0, 0, 1, 1], [], []>} : vector<1x32xf32>, vector<32x32xf32>, vector<1x32xf32> -> vector<1x32xf32>
    %c0_3 = arith.constant 0 : index
    %c0_4 = arith.constant 0 : index
    %3 = vector.load %arg3[%c0_3, %c0_4] : memref<1x32xf32, #tpu.memory_space<vmem>>, vector<1x32xf32>
    %4 = arith.addf %2, %3 : vector<1x32xf32>
    %cst_5 = arith.constant 0.000000e+00 : f32
    %5 = vector.broadcast %cst_5 : f32 to vector<1x32xf32>
    %6 = arith.maximumf %4, %5 : vector<1x32xf32>
    %c0_6 = arith.constant 0 : index
    %c0_7 = arith.constant 0 : index
    %7 = vector.load %arg4[%c0_6, %c0_7] : memref<32x32xf32, #tpu.memory_space<vmem>>, vector<32x32xf32>
    %cst_8 = arith.constant dense<0.000000e+00> : vector<1x32xf32>
    %8 = tpu.matmul %6, %7, %cst_8 {dimension_numbers = #tpu.dot_dimension_numbers<[1], [0], [0], [1], [0, 0, 1, 1], [], []>} : vector<1x32xf32>, vector<32x32xf32>, vector<1x32xf32> -> vector<1x32xf32>
    %c0_9 = arith.constant 0 : index
    %c0_10 = arith.constant 0 : index
    %9 = vector.load %arg5[%c0_9, %c0_10] : memref<1x32xf32, #tpu.memory_space<vmem>>, vector<1x32xf32>
    %10 = arith.addf %8, %9 : vector<1x32xf32>
    %cst_11 = arith.constant 0.000000e+00 : f32
    %11 = vector.broadcast %cst_11 : f32 to vector<1x32xf32>
    %12 = arith.maximumf %10, %11 : vector<1x32xf32>
    %c0_12 = arith.constant 0 : index
    %c0_13 = arith.constant 0 : index
    %13 = vector.load %arg6[%c0_12, %c0_13] : memref<32x32xf32, #tpu.memory_space<vmem>>, vector<32x32xf32>
    %cst_14 = arith.constant dense<0.000000e+00> : vector<1x32xf32>
    %14 = tpu.matmul %12, %13, %cst_14 {dimension_numbers = #tpu.dot_dimension_numbers<[1], [0], [0], [1], [0, 0, 1, 1], [], []>} : vector<1x32xf32>, vector<32x32xf32>, vector<1x32xf32> -> vector<1x32xf32>
    %c0_15 = arith.constant 0 : index
    %c0_16 = arith.constant 0 : index
    %15 = vector.load %arg7[%c0_15, %c0_16] : memref<1x32xf32, #tpu.memory_space<vmem>>, vector<1x32xf32>
    %16 = arith.addf %14, %15 : vector<1x32xf32>
    %cst_17 = arith.constant 0.000000e+00 : f32
    %17 = vector.broadcast %cst_17 : f32 to vector<1x32xf32>
    %18 = arith.maximumf %16, %17 : vector<1x32xf32>
    %c0_18 = arith.constant 0 : index
    %c0_19 = arith.constant 0 : index
    %19 = vector.load %arg8[%c0_18, %c0_19] : memref<32x32xf32, #tpu.memory_space<vmem>>, vector<32x32xf32>
    %cst_20 = arith.constant dense<0.000000e+00> : vector<1x32xf32>
    %20 = tpu.matmul %18, %19, %cst_20 {dimension_numbers = #tpu.dot_dimension_numbers<[1], [0], [0], [1], [0, 0, 1, 1], [], []>} : vector<1x32xf32>, vector<32x32xf32>, vector<1x32xf32> -> vector<1x32xf32>
    %c0_21 = arith.constant 0 : index
    %c0_22 = arith.constant 0 : index
    %21 = vector.load %arg9[%c0_21, %c0_22] : memref<1x32xf32, #tpu.memory_space<vmem>>, vector<1x32xf32>
    %22 = arith.addf %20, %21 : vector<1x32xf32>
    %c0_23 = arith.constant 0 : index
    %c0_24 = arith.constant 0 : index
    %23 = vector.load %arg10[%c0_23, %c0_24] : memref<1x32xf32, #tpu.memory_space<vmem>>, vector<1x32xf32>
    tpu.vector_store %arg10[%c0_23, %c0_24], %22 {strides = array<i32>} : memref<1x32xf32, #tpu.memory_space<vmem>>, vector<1x32xf32>,
    return
  }
  func.func @transform_0(%arg0: i32) -> (i32, i32) {
    %c0_i32 = arith.constant 0 : i32
    %c0_i32_0 = arith.constant 0 : i32
    %c0_i32_1 = arith.constant 0 : i32
    return %c0_i32, %c0_i32_0 : i32, i32
  }
  func.func @transform_1(%arg0: i32) -> (i32, i32) {
    %c0_i32 = arith.constant 0 : i32
    %c0_i32_0 = arith.constant 0 : i32
    %c0_i32_1 = arith.constant 0 : i32
    return %c0_i32, %c0_i32_0 : i32, i32
  }
  func.func @transform_2(%arg0: i32) -> (i32, i32) {
    %c0_i32 = arith.constant 0 : i32
    %c0_i32_0 = arith.constant 0 : i32
    %c0_i32_1 = arith.constant 0 : i32
    return %c0_i32, %c0_i32_0 : i32, i32
  }
  func.func @transform_3(%arg0: i32) -> (i32, i32) {
    %c0_i32 = arith.constant 0 : i32
    %c0_i32_0 = arith.constant 0 : i32
    %c0_i32_1 = arith.constant 0 : i32
    return %c0_i32, %c0_i32_0 : i32, i32
  }
  func.func @transform_4(%arg0: i32) -> (i32, i32) {
    %c0_i32 = arith.constant 0 : i32
    %c0_i32_0 = arith.constant 0 : i32
    %c0_i32_1 = arith.constant 0 : i32
    return %c0_i32, %c0_i32_0 : i32, i32
  }
  func.func @transform_5(%arg0: i32) -> (i32, i32) {
    %c0_i32 = arith.constant 0 : i32
    %c0_i32_0 = arith.constant 0 : i32
    %c0_i32_1 = arith.constant 0 : i32
    return %c0_i32, %c0_i32_0 : i32, i32
  }
  func.func @transform_6(%arg0: i32) -> (i32, i32) {
    %c0_i32 = arith.constant 0 : i32
    %c0_i32_0 = arith.constant 0 : i32
    %c0_i32_1 = arith.constant 0 : i32
    return %c0_i32, %c0_i32_0 : i32, i32
  }
  func.func @transform_7(%arg0: i32) -> (i32, i32) {
    %c0_i32 = arith.constant 0 : i32
    %c0_i32_0 = arith.constant 0 : i32
    %c0_i32_1 = arith.constant 0 : i32
    return %c0_i32, %c0_i32_0 : i32, i32
  }
  func.func @transform_8(%arg0: i32) -> (i32, i32) {
    %c0_i32 = arith.constant 0 : i32
    %c0_i32_0 = arith.constant 0 : i32
    %c0_i32_1 = arith.constant 0 : i32
    return %c0_i32, %c0_i32_0 : i32, i32
  }
  func.func @transform_9(%arg0: i32) -> (i32, i32) {
    %c0_i32 = arith.constant 0 : i32
    %c0_i32_0 = arith.constant 0 : i32
    %c0_i32_1 = arith.constant 0 : i32
    return %c0_i32, %c0_i32_0 : i32, i32
  }
}

</mosaic_0001>

<llo_original>
// kernel: tpu_custom_call.1
$region0: #{tpu_custom_call.1}
  #allocation0 [shape = 'u32[]', space=smem, size = 0x4, offset = 0x4, fixed_abs, tag = 'smem constant byte address 0x4 - core index']
  #allocation1 [shape = 'u32[72,128]{1,0:T(1,128)}', space=vmem, size = 0x9000, scoped, tag = 'internal scratch']
  %s0 = inlined_call_operand.hbm [shape: f32[1,32], index: 0, kind: input, shape index: {}]
  %s1 = inlined_call_operand.hbm [shape: f32[32,32], index: 1, kind: input, shape index: {}]
  %s2 = inlined_call_operand.vmem [shape: f32[1,32], index: 2, kind: input, shape index: {}]
  %s3 = inlined_call_operand.hbm [shape: f32[32,32], index: 3, kind: input, shape index: {}]
  %s4 = inlined_call_operand.vmem [shape: f32[1,32], index: 4, kind: input, shape index: {}]
  %s5 = inlined_call_operand.hbm [shape: f32[32,32], index: 5, kind: input, shape index: {}]
  %s6 = inlined_call_operand.vmem [shape: f32[1,32], index: 6, kind: input, shape index: {}]
  %s7 = inlined_call_operand.hbm [shape: f32[32,32], index: 7, kind: input, shape index: {}]
  %s8 = inlined_call_operand.vmem [shape: f32[1,32], index: 8, kind: input, shape index: {}]
  %s9 = inlined_call_operand.hbm [shape: f32[1,32], index: 9, kind: output, shape index: {}]
  %s10 = sld [smem:[#allocation0]]
  $region66: #{tpu_custom_call.1} parent=0
    _
  %s12 = ssub.s32 1, %s10
  %s13 = scalar_select 0, %s12, %s10
  $region1: #{tpu_custom_call.1} parent=0
    #allocation2 [shape = 'u8[512]{0}', space=vmem, size = 0x400, scoped, tag = 'input window, operand 0, single buffered']
    #allocation3 [shape = 's32[1]{0}', space=sflag, size = 0x4, scoped, tag = 'scoped memory for tpu_custom_call.1']
    #allocation4 [shape = 's32[1]{0}', space=sflag, size = 0x4, scoped, tag = 'scoped memory for tpu_custom_call.1']
    #allocation5 [shape = 'u8[16384]{0}', space=vmem, size = 0x4000, scoped, tag = 'input window, operand 1, single buffered']
    #allocation6 [shape = 's32[1]{0}', space=sflag, size = 0x4, scoped, tag = 'scoped memory for tpu_custom_call.1']
    #allocation7 [shape = 'u8[16384]{0}', space=vmem, size = 0x4000, scoped, tag = 'input window, operand 3, single buffered']
    #allocation8 [shape = 'u8[16384]{0}', space=vmem, size = 0x4000, scoped, tag = 'input window, operand 5, single buffered']
    #allocation9 [shape = 's32[1]{0}', space=sflag, size = 0x4, scoped, tag = 'scoped memory for tpu_custom_call.1']
    #allocation10 [shape = 'u8[16384]{0}', space=vmem, size = 0x4000, scoped, tag = 'input window, operand 7, single buffered']
    #allocation11 [shape = 'u8[512]{0}', space=vmem, size = 0x400, scoped, tag = 'output window, operand 0, single buffered']
    %14 = vsyncpa [#allocation3], 0
    %15 = vsyncpa [#allocation6], 0
    %16 = vsyncpa [#allocation9], 0
    %17 = vsyncpa [#allocation4], 0
    // Predicated region
    $region2: #{tpu_custom_call.1} parent=1 // pred_check
      _
    $region3: #{tpu_custom_call.1} parent=1 // pred_check_branch
      %19 = sbr.rel (0) target = $region5
    $region4: #{tpu_custom_call.1} parent=1 // pred_region
      %21 = vsyncadd [#allocation3], 0
      %s23 = sshll.u32 %s0, 4
      %s24 = int_to_ptr.hbm [resolvable:$true] %s23
      %s25 = sshll.u32 [#allocation2], 4
      %s26 = int_to_ptr.vmem [resolvable:$true] %s25
      %28 = dma.hbm_to_vmem [thread:$0]  %s24, 16, %s26, [#allocation3]
    $region5: #{tpu_custom_call.1} parent=1 // pred_fallthru
      _
    // Predicated region
    $region6: #{tpu_custom_call.1} parent=1 // pred_check
      _
    $region7: #{tpu_custom_call.1} parent=1 // pred_check_branch
      %30 = sbr.rel (0) target = $region9
    $region8: #{tpu_custom_call.1} parent=1 // pred_region
      %32 = vsyncadd [#allocation6], 0
      %s33 = sshll.u32 %s1, 4
      %s34 = int_to_ptr.hbm [resolvable:$true] %s33
      %s35 = sshll.u32 [#allocation5], 4
      %s36 = int_to_ptr.vmem [resolvable:$true] %s35
      %41 = dma.hbm_to_vmem [thread:$0]  %s34, 512, %s36, [#allocation6], 128, 128, 8
    $region9: #{tpu_custom_call.1} parent=1 // pred_fallthru
      _
    // Predicated region
    $region10: #{tpu_custom_call.1} parent=1 // pred_check
      _
    $region11: #{tpu_custom_call.1} parent=1 // pred_check_branch
      %43 = sbr.rel (0) target = $region13
    $region12: #{tpu_custom_call.1} parent=1 // pred_region
      _
    $region13: #{tpu_custom_call.1} parent=1 // pred_fallthru
      _
    // Predicated region
    $region14: #{tpu_custom_call.1} parent=1 // pred_check
      _
    $region15: #{tpu_custom_call.1} parent=1 // pred_check_branch
      %45 = sbr.rel (0) target = $region17
    $region16: #{tpu_custom_call.1} parent=1 // pred_region
      %47 = vsyncadd [#allocation6], 0
      %s48 = sshll.u32 %s3, 4
      %s49 = int_to_ptr.hbm [resolvable:$true] %s48
      %s50 = sshll.u32 [#allocation7], 4
      %s51 = int_to_ptr.vmem [resolvable:$true] %s50
      %56 = dma.hbm_to_vmem [thread:$0]  %s49, 512, %s51, [#allocation6], 128, 128, 8
    $region17: #{tpu_custom_call.1} parent=1 // pred_fallthru
      _
    // Predicated region
    $region18: #{tpu_custom_call.1} parent=1 // pred_check
      _
    $region19: #{tpu_custom_call.1} parent=1 // pred_check_branch
      %58 = sbr.rel (0) target = $region21
    $region20: #{tpu_custom_call.1} parent=1 // pred_region
      _
    $region21: #{tpu_custom_call.1} parent=1 // pred_fallthru
      _
    // Predicated region
    $region22: #{tpu_custom_call.1} parent=1 // pred_check
      _
    $region23: #{tpu_custom_call.1} parent=1 // pred_check_branch
      %60 = sbr.rel (0) target = $region25
    $region24: #{tpu_custom_call.1} parent=1 // pred_region
      %62 = vsyncadd [#allocation9], 0
      %s63 = sshll.u32 %s5, 4
      %s64 = int_to_ptr.hbm [resolvable:$true] %s63
      %s65 = sshll.u32 [#allocation8], 4
      %s66 = int_to_ptr.vmem [resolvable:$true] %s65
      %71 = dma.hbm_to_vmem [thread:$0]  %s64, 512, %s66, [#allocation9], 128, 128, 8
    $region25: #{tpu_custom_call.1} parent=1 // pred_fallthru
      _
    // Predicated region
    $region26: #{tpu_custom_call.1} parent=1 // pred_check
      _
    $region27: #{tpu_custom_call.1} parent=1 // pred_check_branch
      %73 = sbr.rel (0) target = $region29
    $region28: #{tpu_custom_call.1} parent=1 // pred_region
      _
    $region29: #{tpu_custom_call.1} parent=1 // pred_fallthru
      _
    // Predicated region
    $region30: #{tpu_custom_call.1} parent=1 // pred_check
      _
    $region31: #{tpu_custom_call.1} parent=1 // pred_check_branch
      %75 = sbr.rel (0) target = $region33
    $region32: #{tpu_custom_call.1} parent=1 // pred_region
      %77 = vsyncadd [#allocation9], 0
      %s78 = sshll.u32 %s7, 4
      %s79 = int_to_ptr.hbm [resolvable:$true] %s78
      %s80 = sshll.u32 [#allocation10], 4
      %s81 = int_to_ptr.vmem [resolvable:$true] %s80
      %86 = dma.hbm_to_vmem [thread:$0]  %s79, 512, %s81, [#allocation9], 128, 128, 8
    $region33: #{tpu_custom_call.1} parent=1 // pred_fallthru
      _
    // Predicated region
    $region34: #{tpu_custom_call.1} parent=1 // pred_check
      _
    $region35: #{tpu_custom_call.1} parent=1 // pred_check_branch
      %88 = sbr.rel (0) target = $region37
    $region36: #{tpu_custom_call.1} parent=1 // pred_region
      _
    $region37: #{tpu_custom_call.1} parent=1 // pred_fallthru
      _
    // Predicated region
    $region38: #{tpu_custom_call.1} parent=1 // pred_check
      _
    $region39: #{tpu_custom_call.1} parent=1 // pred_check_branch
      %90 = sbr.rel (0) target = $region41
    $region40: #{tpu_custom_call.1} parent=1 // pred_region
      %92 = dma.done [#allocation3], 16
    $region41: #{tpu_custom_call.1} parent=1 // pred_fallthru
      _
    // Predicated region
    $region42: #{tpu_custom_call.1} parent=1 // pred_check
      _
    $region43: #{tpu_custom_call.1} parent=1 // pred_check_branch
      %94 = sbr.rel (0) target = $region45
    $region44: #{tpu_custom_call.1} parent=1 // pred_region
      %96 = dma.done [#allocation6], 512
    $region45: #{tpu_custom_call.1} parent=1 // pred_fallthru
      _
    // Predicated region
    $region46: #{tpu_custom_call.1} parent=1 // pred_check
      _
    $region47: #{tpu_custom_call.1} parent=1 // pred_check_branch
      %98 = sbr.rel (0) target = $region49
    $region48: #{tpu_custom_call.1} parent=1 // pred_region
      %100 = dma.done [#allocation6], 512
    $region49: #{tpu_custom_call.1} parent=1 // pred_fallthru
      _
    // Predicated region
    $region50: #{tpu_custom_call.1} parent=1 // pred_check
      _
    $region51: #{tpu_custom_call.1} parent=1 // pred_check_branch
      %102 = sbr.rel (0) target = $region53
    $region52: #{tpu_custom_call.1} parent=1 // pred_region
      %104 = dma.done [#allocation9], 512
    $region53: #{tpu_custom_call.1} parent=1 // pred_fallthru
      _
    // Predicated region
    $region54: #{tpu_custom_call.1} parent=1 // pred_check
      _
    $region55: #{tpu_custom_call.1} parent=1 // pred_check_branch
      %106 = sbr.rel (0) target = $region57
    $region56: #{tpu_custom_call.1} parent=1 // pred_region
      %108 = dma.done [#allocation9], 512
    $region57: #{tpu_custom_call.1} parent=1 // pred_fallthru
      _
    %v109 = vld [vmem:[#allocation2] sm:$0x1]
    %v110 = vld [vmem:[#allocation5] sm:$0xff]
    %v111 = vld [vmem:[#allocation5 + $0x8] sm:$0xff]
    %v112 = vld [vmem:[#allocation5 + $0x10] sm:$0xff]
    %v113 = vld [vmem:[#allocation5 + $0x18] sm:$0xff]
    %v114 = vld [vmem:[%s2] sm:$0x1]
    %vm115 = vcmask 261120
    %v117 = vsel %vm115, %v109, 0
    %119 = vmatpush.msra.mxu0 0.0
    %120 = vmatpush.msra.mxu0 0.0
    %121 = vmatpush.msra.mxu0 0.0
    %122 = vmatpush.msra.mxu0 0.0
    %123 = vmatpush.msra.mxu0 0.0
    %124 = vmatpush.msra.mxu0 0.0
    %125 = vmatpush.msra.mxu0 0.0
    %126 = vmatpush.msra.mxu0 0.0
    %127 = vmatpush.msra.mxu0 0.0
    %128 = vmatpush.msra.mxu0 0.0
    %129 = vmatpush.msra.mxu0 0.0
    %130 = vmatpush.msra.mxu0 0.0
    %131 = vmatpush.msra.mxu0 %v113
    %132 = vmatpush.msra.mxu0 %v112
    %133 = vmatpush.msra.mxu0 %v111
    %134 = vmatpush.msra.mxu0 %v110
    %135 = vmatmul.f32.gmra.mxu0 %v117
    %v136 = vpop.f32.mrf.mxu0
    %v137 = vadd.f32 %v114, %v136
    %138 = vdwg.mxu0
    %v139 = vmax.f32 %v137, 0.0
    %v140 = vld [vmem:[#allocation7] sm:$0xff]
    %v141 = vld [vmem:[#allocation7 + $0x8] sm:$0xff]
    %v142 = vld [vmem:[#allocation7 + $0x10] sm:$0xff]
    %v143 = vld [vmem:[#allocation7 + $0x18] sm:$0xff]
    %v144 = vld [vmem:[%s4] sm:$0x1]
    %v146 = vsel %vm115, %v139, 0
    %148 = vmatpush.msra.mxu0 0.0
    %149 = vmatpush.msra.mxu0 0.0
    %150 = vmatpush.msra.mxu0 0.0
    %151 = vmatpush.msra.mxu0 0.0
    %152 = vmatpush.msra.mxu0 0.0
    %153 = vmatpush.msra.mxu0 0.0
    %154 = vmatpush.msra.mxu0 0.0
    %155 = vmatpush.msra.mxu0 0.0
    %156 = vmatpush.msra.mxu0 0.0
    %157 = vmatpush.msra.mxu0 0.0
    %158 = vmatpush.msra.mxu0 0.0
    %159 = vmatpush.msra.mxu0 0.0
    %160 = vmatpush.msra.mxu0 %v143
    %161 = vmatpush.msra.mxu0 %v142
    %162 = vmatpush.msra.mxu0 %v141
    %163 = vmatpush.msra.mxu0 %v140
    %164 = vmatmul.f32.gmra.mxu0 %v146
    %v165 = vpop.f32.mrf.mxu0
    %v166 = vadd.f32 %v144, %v165
    %167 = vdwg.mxu0
    %v168 = vmax.f32 %v166, 0.0
    %v169 = vld [vmem:[#allocation8] sm:$0xff]
    %v170 = vld [vmem:[#allocation8 + $0x8] sm:$0xff]
    %v171 = vld [vmem:[#allocation8 + $0x10] sm:$0xff]
    %v172 = vld [vmem:[#allocation8 + $0x18] sm:$0xff]
    %v173 = vld [vmem:[%s6] sm:$0x1]
    %v175 = vsel %vm115, %v168, 0
    %177 = vmatpush.msra.mxu0 0.0
    %178 = vmatpush.msra.mxu0 0.0
    %179 = vmatpush.msra.mxu0 0.0
    %180 = vmatpush.msra.mxu0 0.0
    %181 = vmatpush.msra.mxu0 0.0
    %182 = vmatpush.msra.mxu0 0.0
    %183 = vmatpush.msra.mxu0 0.0
    %184 = vmatpush.msra.mxu0 0.0
    %185 = vmatpush.msra.mxu0 0.0
    %186 = vmatpush.msra.mxu0 0.0
    %187 = vmatpush.msra.mxu0 0.0
    %188 = vmatpush.msra.mxu0 0.0
    %189 = vmatpush.msra.mxu0 %v172
    %190 = vmatpush.msra.mxu0 %v171
    %191 = vmatpush.msra.mxu0 %v170
    %192 = vmatpush.msra.mxu0 %v169
    %193 = vmatmul.f32.gmra.mxu0 %v175
    %v194 = vpop.f32.mrf.mxu0
    %v195 = vadd.f32 %v173, %v194
    %196 = vdwg.mxu0
    %v197 = vmax.f32 %v195, 0.0
    %v198 = vld [vmem:[#allocation10] sm:$0xff]
    %v199 = vld [vmem:[#allocation10 + $0x8] sm:$0xff]
    %v200 = vld [vmem:[#allocation10 + $0x10] sm:$0xff]
    %v201 = vld [vmem:[#allocation10 + $0x18] sm:$0xff]
    %v202 = vld [vmem:[%s8] sm:$0x1]
    %v204 = vsel %vm115, %v197, 0
    %206 = vmatpush.msra.mxu0 0.0
    %207 = vmatpush.msra.mxu0 0.0
    %208 = vmatpush.msra.mxu0 0.0
    %209 = vmatpush.msra.mxu0 0.0
    %210 = vmatpush.msra.mxu0 0.0
    %211 = vmatpush.msra.mxu0 0.0
    %212 = vmatpush.msra.mxu0 0.0
    %213 = vmatpush.msra.mxu0 0.0
    %214 = vmatpush.msra.mxu0 0.0
    %215 = vmatpush.msra.mxu0 0.0
    %216 = vmatpush.msra.mxu0 0.0
    %217 = vmatpush.msra.mxu0 0.0
    %218 = vmatpush.msra.mxu0 %v201
    %219 = vmatpush.msra.mxu0 %v200
    %220 = vmatpush.msra.mxu0 %v199
    %221 = vmatpush.msra.mxu0 %v198
    %222 = vmatmul.f32.gmra.mxu0 %v204
    %v223 = vpop.f32.mrf.mxu0
    %v224 = vadd.f32 %v202, %v223
    %225 = vdwg.mxu0
    %vm226 = vcmask 253952
    %227 = vst.msk [vmem:[#allocation11] sm:$0x1] %vm226, %v224
    // Predicated region
    $region58: #{tpu_custom_call.1} parent=1 // pred_check
      _
    $region59: #{tpu_custom_call.1} parent=1 // pred_check_branch
      %229 = sbr.rel (0) target = $region61
    $region60: #{tpu_custom_call.1} parent=1 // pred_region
      %231 = vsyncadd [#allocation4], 0
      %s233 = sshll.u32 [#allocation11], 4
      %s234 = int_to_ptr.vmem [resolvable:$true] %s233
      %s235 = sshll.u32 %s9, 4
      %s236 = int_to_ptr.hbm [resolvable:$true] %s235
      %238 = dma.vmem_to_hbm [thread:$0]  %s234, 16, %s236, [#allocation4]
    $region61: #{tpu_custom_call.1} parent=1 // pred_fallthru
      _
    // Predicated region
    $region62: #{tpu_custom_call.1} parent=1 // pred_check
      _
    $region63: #{tpu_custom_call.1} parent=1 // pred_check_branch
      %240 = sbr.rel (0) target = $region65
    $region64: #{tpu_custom_call.1} parent=1 // pred_region
      %242 = dma.done [#allocation4], 16
    $region65: #{tpu_custom_call.1} parent=1 // pred_fallthru
      _
    %243 = vsyncpa [#allocation3], 1
    %244 = vsyncpa [#allocation6], 1
    %245 = vsyncpa [#allocation9], 1
    %246 = vsyncpa [#allocation4], 1

</llo_original>
